<compile_context>
chip_gen: v5e
topology: v5e:2x2
jax: 0.10.0
libtpu: 0.0.40
codegen_flags: <defaults>
</compile_context>

<pallas_src>
import jax
import jax.numpy as jnp
from jax.experimental import pallas as pl
from jax.experimental.pallas import tpu as pltpu


def _round_up(v, m):
    return ((v + m - 1) // m) * m


def _vmem_capacity_bytes():
    try:
        cap = getattr(pltpu.get_tpu_info(), "vmem_capacity_bytes", None)
        if cap:
            return int(cap)
    except Exception:
        pass
    return 64 << 20  # conservative fallback (v7x per-TC capacity)


def uniscore_head_single_kernel(x_ref, w_ref, b_ref, o_ref):
    """Whole-S tile: pool tokens, apply (flipped, 1/S-scaled) head, softmax.

    x_ref : [block_n, S, H] float  encoder features (pair rows x tokens)
    w_ref : [H, C] f32  — already class-flipped and pre-scaled by 1/S
    b_ref : [1, C] f32  — already class-flipped
    o_ref : [block_n, C] f32  probabilities (== torch softmax(-1).flip(dims=[1]))
    """
    # Token-sum pooling, accumulated in f32 (v5e VPU has no bf16 adds).  The
    # cross-sublane reduce is second-order while the kernel is HBM-bound; if a
    # bundle check ever shows XLU/vld saturation, restructure as chunked VPU adds.
    pooled = jnp.sum(x_ref[...].astype(jnp.float32), axis=1)            # [bn, H]
    logits = jnp.dot(pooled, w_ref[...],
                     preferred_element_type=jnp.float32) + b_ref[...]
    m = jnp.max(logits, axis=-1, keepdims=True)
    e = jnp.exp(logits - m)
    o_ref[...] = (e / jnp.sum(e, axis=-1, keepdims=True)).astype(o_ref.dtype)


def uniscore_head_acc_kernel(x_ref, w_ref, b_ref, o_ref, acc_ref):
    """S-split variant: f32 VMEM accumulator carried across the S grid axis."""
    s = pl.program_id(1)

    @pl.when(s == 0)
    def _():
        acc_ref[...] = jnp.zeros_like(acc_ref)

    acc_ref[...] += jnp.sum(x_ref[...].astype(jnp.float32), axis=1)

    @pl.when(s == pl.num_programs(1) - 1)
    def _():
        logits = jnp.dot(acc_ref[...], w_ref[...],
                         preferred_element_type=jnp.float32) + b_ref[...]
        m = jnp.max(logits, axis=-1, keepdims=True)
        e = jnp.exp(logits - m)
        o_ref[...] = (e / jnp.sum(e, axis=-1, keepdims=True)).astype(o_ref.dtype)


def uniscore_head(x, w, b, *, block_n=None, block_s=None):
    """x: [N, S, H] float features, w: [H, C], b: [C] or [1, C].

    Returns [N, C] f32 == softmax(mean_pool(x) @ w + b, axis=-1)[:, ::-1].
    """
    N, S, H = x.shape
    C = w.shape[1]

    # Fold the class-axis flip and the 1/S mean factor into the head params
    # (softmax is permutation-equivariant) — done once on the host.
    w_eff = w[:, ::-1].astype(jnp.float32) / jnp.float32(S)
    b_eff = jnp.reshape(b, (1, C))[:, ::-1].astype(jnp.float32)

    # Stream x in its native float dtype; a standalone astype would add a full
    # HBM read+write pass to a kernel that is purely HBM-bandwidth bound.
    if not jnp.issubdtype(x.dtype, jnp.floating):
        x = x.astype(jnp.float32)
    itemsize = jnp.dtype(x.dtype).itemsize
    sub = 16 if itemsize == 2 else 8           # sublane packing multiple

    if block_s is None:
        block_s = S                            # prefer one contiguous DMA per row
    assert S % block_s == 0, "block_s must divide S (accumulator correctness)"
    assert block_s == S or block_s % sub == 0, \
        "partial S tiles must be a multiple of the sublane packing"

    # ---- VMEM accounting with lane/sublane padding -------------------------
    Hp = _round_up(H, 128)                     # lane dim of x tile / acc / w rows
    Cp = _round_up(C, 128)                     # lane dim of w / b / out / logits
    bs_p = _round_up(block_s, sub)
    cap = _vmem_capacity_bytes()
    budget = (cap * 5) // 8                    # ~62.5%: v5e/v6e ~80 MiB, v7x ~40 MiB

    per_row = (2 * bs_p * Hp * itemsize        # x tile, double-buffered
               + Hp * 4                        # f32 pooled / accumulator row
               + 2 * Cp * 4                    # output tile, double-buffered
               + 2 * Cp * 4)                   # epilogue temporaries (logits, exp)
    fixed = (2 * _round_up(H, 8) * Cp * 4      # w (double-buffered)
             + 2 * 8 * Cp * 4)                 # b (double-buffered)

    if block_n is None:
        block_n = (budget - fixed - (4 << 20)) // per_row
    block_n = max(8, (block_n // 8) * 8)       # output sublane dim: multiple of 8
    if block_n >= N:
        block_n = N                            # full-dim block is always legal

    need = fixed + block_n * per_row
    vmem_limit = int(min(int(cap * 0.9), need + (16 << 20)))

    gn = pl.cdiv(N, block_n)                   # ragged last N block: garbage rows
    gs = S // block_s                          # are computed but never stored.

    out_shape = jax.ShapeDtypeStruct((N, C), jnp.float32)

    def run(n_sem):
        if gs == 1:
            grid_spec = pltpu.PrefetchScalarGridSpec(
                num_scalar_prefetch=0,
                grid=(gn,),
                in_specs=[
                    pl.BlockSpec((block_n, S, H), lambda i: (i, 0, 0)),
                    pl.BlockSpec((H, C), lambda i: (0, 0)),
                    pl.BlockSpec((1, C), lambda i: (0, 0)),
                ],
                out_specs=pl.BlockSpec((block_n, C), lambda i: (i, 0)),
            )
            kern = uniscore_head_single_kernel
            dims = (n_sem,)
        else:
            grid_spec = pltpu.PrefetchScalarGridSpec(
                num_scalar_prefetch=0,
                grid=(gn, gs),
                in_specs=[
                    pl.BlockSpec((block_n, block_s, H), lambda i, s: (i, s, 0)),
                    pl.BlockSpec((H, C), lambda i, s: (0, 0)),
                    pl.BlockSpec((1, C), lambda i, s: (0, 0)),
                ],
                out_specs=pl.BlockSpec((block_n, C), lambda i, s: (i, 0)),
                scratch_shapes=[pltpu.VMEM((block_n, H), jnp.float32)],
            )
            kern = uniscore_head_acc_kernel
            dims = (n_sem, "arbitrary")
        return pl.pallas_call(
            kern,
            out_shape=out_shape,
            grid_spec=grid_spec,
            compiler_params=pltpu.CompilerParams(
                dimension_semantics=dims,
                vmem_limit_bytes=vmem_limit),
        )(x, w_eff, b_eff)

    if gs == 1 and gn >= 2:
        # v7x (2 TensorCores/chip): shard independent N blocks across both cores.
        # Guarded: falls back to "parallel" if this chip/lowering rejects it.
        try:
            return jax.block_until_ready(run(pltpu.CORE_PARALLEL))
        except Exception:
            pass
    return run("parallel")


if __name__ == "__main__":
    # B text prompts, each with num_seq generated candidates -> N = B*num_seq pairs
    B, num_seq, S, H, C, V = 2, 4, 8, 32, 3, 50
    N = B * num_seq

    key = jax.random.PRNGKey(0)
    k_tok, k_emb, k_w, k_b = jax.random.split(key, 4)

    # TODO(synk): HF tokenizer + pretrained MNLI transformer backbone have no Pallas
    # equivalent without checkpoints; replaced by deterministic synthetic token ids
    # + a bf16 embedding table (plain JAX glue) feeding the Pallas classification head.
    token_ids = jax.random.randint(k_tok, (N, S), 0, V)
    emb_table = (jax.random.normal(k_emb, (V, H), dtype=jnp.float32) * 0.1
                 ).astype(jnp.bfloat16)
    w = jax.random.normal(k_w, (H, C), dtype=jnp.float32) * 0.1
    b = jax.random.normal(k_b, (1, C), dtype=jnp.float32) * 0.1

    x = emb_table[token_ids]                 # [N, S, H] bf16 "encoder" features
                                             # (cast fused into the producer gather)

    out = uniscore_head(x, w, b)             # [N, 3]
    out = jax.block_until_ready(out)

    # reference (pure JAX, identical bf16 feature quantization):
    # softmax(-1) then flip class axis  ==  torch `out.softmax(-1).flip(dims=[1])`
    x32 = x.astype(jnp.float32)
    pooled = x32.mean(axis=1)
    logits = pooled @ w + b
    ref = jax.nn.softmax(logits, axis=-1)[:, ::-1]
    assert jnp.allclose(out, ref, atol=5e-4, rtol=5e-4), "mismatch vs reference"

    # matches `out_total.view(len(data['text_gen']), num_sequences, 3)`
    scores = out.reshape(B, num_seq, C)
    jax.block_until_ready(scores)
    print("KERNEL_OK")
</pallas_src>

<mosaic_0001>
module attributes {stable_mosaic.version = 11 : i64} {
  func.func @uniscore_head_single_kernel(%arg0: i32, %arg1: memref<8x8x32xbf16, #tpu.memory_space<vmem>>, %arg2: memref<32x3xf32, #tpu.memory_space<vmem>>, %arg3: memref<1x3xf32, #tpu.memory_space<vmem>>, %arg4: memref<8x3xf32, #tpu.memory_space<vmem>>) attributes {dimension_semantics = [#tpu.dimension_semantics<parallel>], iteration_bounds = array<i64: 1>, scalar_prefetch = 0 : i64, scratch_operands = 0 : i64, tpu.core_type = #tpu.core_type<tc>, window_params = [{transform_indices = @transform_0, window_bounds = array<i64: 8, 8, 32>}, {pipeline_mode = #tpu.pipeline_mode<synchronous>, transform_indices = @transform_1, window_bounds = array<i64: 32, 3>}, {pipeline_mode = #tpu.pipeline_mode<synchronous>, transform_indices = @transform_2, window_bounds = array<i64: 1, 3>}, {transform_indices = @transform_3, window_bounds = array<i64: 8, 3>}]} {
    %c0 = arith.constant 0 : index
    %c0_0 = arith.constant 0 : index
    %c0_1 = arith.constant 0 : index
    %0 = vector.load %arg1[%c0, %c0_0, %c0_1] : memref<8x8x32xbf16, #tpu.memory_space<vmem>>, vector<8x8x32xbf16>
    %1 = arith.extf %0 : vector<8x8x32xbf16> to vector<8x8x32xf32>
    %cst = arith.constant dense<0.000000e+00> : vector<8x32xf32>
    %2 = vector.multi_reduction <add>, %1, %cst [1] : vector<8x8x32xf32> to vector<8x32xf32>
    %c0_2 = arith.constant 0 : index
    %c0_3 = arith.constant 0 : index
    %3 = vector.load %arg2[%c0_2, %c0_3] : memref<32x3xf32, #tpu.memory_space<vmem>>, vector<32x3xf32>
    %cst_4 = arith.constant dense<0.000000e+00> : vector<8x3xf32>
    %4 = tpu.matmul %2, %3, %cst_4 {dimension_numbers = #tpu.dot_dimension_numbers<[1], [0], [0], [1], [0, 0, 1, 1], [], []>} : vector<8x32xf32>, vector<32x3xf32>, vector<8x3xf32> -> vector<8x3xf32>
    %c0_5 = arith.constant 0 : index
    %c0_6 = arith.constant 0 : index
    %5 = vector.load %arg3[%c0_5, %c0_6] : memref<1x3xf32, #tpu.memory_space<vmem>>, vector<1x3xf32>
    %6 = vector.broadcast %5 : vector<1x3xf32> to vector<8x3xf32>
    %7 = arith.addf %4, %6 : vector<8x3xf32>
    %cst_7 = arith.constant dense<0xFF800000> : vector<8xf32>
    %8 = vector.multi_reduction <maximumf>, %7, %cst_7 [1] : vector<8x3xf32> to vector<8xf32>
    %9 = vector.shape_cast %8 : vector<8xf32> to vector<8x1xf32>
    %10 = vector.broadcast %9 : vector<8x1xf32> to vector<8x3xf32>
    %11 = arith.subf %7, %10 : vector<8x3xf32>
    %12 = math.exp %11 : vector<8x3xf32>
    %cst_8 = arith.constant dense<0.000000e+00> : vector<8xf32>
    %13 = vector.multi_reduction <add>, %12, %cst_8 [1] : vector<8x3xf32> to vector<8xf32>
    %14 = vector.shape_cast %13 : vector<8xf32> to vector<8x1xf32>
    %15 = vector.broadcast %14 : vector<8x1xf32> to vector<8x3xf32>
    %16 = arith.divf %12, %15 : vector<8x3xf32>
    %c0_9 = arith.constant 0 : index
    %c0_10 = arith.constant 0 : index
    %17 = vector.load %arg4[%c0_9, %c0_10] : memref<8x3xf32, #tpu.memory_space<vmem>>, vector<8x3xf32>
    tpu.vector_store %arg4[%c0_9, %c0_10], %16 {strides = array<i32>} : memref<8x3xf32, #tpu.memory_space<vmem>>, vector<8x3xf32>,
    return
  }
  func.func @transform_0(%arg0: i32) -> (i32, i32, i32) {
    %c0_i32 = arith.constant 0 : i32
    %c0_i32_0 = arith.constant 0 : i32
    %c0_i32_1 = arith.constant 0 : i32
    return %arg0, %c0_i32, %c0_i32_0 : i32, i32, i32
  }
  func.func @transform_1(%arg0: i32) -> (i32, i32) {
    %c0_i32 = arith.constant 0 : i32
    %c0_i32_0 = arith.constant 0 : i32
    %c0_i32_1 = arith.constant 0 : i32
    return %c0_i32, %c0_i32_0 : i32, i32
  }
  func.func @transform_2(%arg0: i32) -> (i32, i32) {
    %c0_i32 = arith.constant 0 : i32
    %c0_i32_0 = arith.constant 0 : i32
    %c0_i32_1 = arith.constant 0 : i32
    return %c0_i32, %c0_i32_0 : i32, i32
  }
  func.func @transform_3(%arg0: i32) -> (i32, i32) {
    %c0_i32 = arith.constant 0 : i32
    %c0_i32_0 = arith.constant 0 : i32
    return %arg0, %c0_i32 : i32, i32
  }
}

</mosaic_0001>

<llo_original>
// kernel: tpu_custom_call.1
$region0: #{tpu_custom_call.1}
  #allocation0 [shape = 'u32[]', space=smem, size = 0x4, offset = 0x4, fixed_abs, tag = 'smem constant byte address 0x4 - core index']
  #allocation1 [shape = 'u32[72,128]{1,0:T(1,128)}', space=vmem, size = 0x9000, scoped, tag = 'internal scratch']
  %s0 = inlined_call_operand.vmem [shape: bf16[8,8,32], index: 0, kind: input, shape index: {}]
  %s1 = inlined_call_operand.vmem [shape: f32[32,3], index: 1, kind: input, shape index: {}]
  %s2 = inlined_call_operand.vmem [shape: f32[1,3], index: 2, kind: input, shape index: {}]
  %s3 = inlined_call_operand.vmem [shape: f32[8,3], index: 3, kind: output, shape index: {}]
  %s4 = sld [smem:[#allocation0]]
  $region22: #{tpu_custom_call.1} parent=0
    _
  %s6 = ssub.s32 1, %s4
  %s7 = scalar_select 0, %s6, %s4
  // Predicated region
  $region2: #{tpu_custom_call.1} parent=0 // pred_check
    _
  $region3: #{tpu_custom_call.1} parent=0 // pred_check_branch
    %9 = sbr.rel (0) target = $region5
  $region4: #{tpu_custom_call.1} parent=0 // pred_region
    _
  $region5: #{tpu_custom_call.1} parent=0 // pred_fallthru
    _
  // Predicated region
  $region6: #{tpu_custom_call.1} parent=0 // pred_check
    _
  $region7: #{tpu_custom_call.1} parent=0 // pred_check_branch
    %11 = sbr.rel (0) target = $region9
  $region8: #{tpu_custom_call.1} parent=0 // pred_region
    _
  $region9: #{tpu_custom_call.1} parent=0 // pred_fallthru
    _
  // Predicated region
  $region10: #{tpu_custom_call.1} parent=0 // pred_check
    _
  $region11: #{tpu_custom_call.1} parent=0 // pred_check_branch
    %13 = sbr.rel (0) target = $region13
  $region12: #{tpu_custom_call.1} parent=0 // pred_region
    _
  $region13: #{tpu_custom_call.1} parent=0 // pred_fallthru
    _
  %v14 = vld [vmem:[%s0] sm:$0xf]
  %v15 = vld [vmem:[%s0 + $0x4] sm:$0xf]
  %v16 = vld [vmem:[%s0 + $0x8] sm:$0xf]
  %v17 = vld [vmem:[%s0 + $0xc] sm:$0xf]
  %v18 = vld [vmem:[%s0 + $0x10] sm:$0xf]
  %v19 = vld [vmem:[%s0 + $0x14] sm:$0xf]
  %v20 = vld [vmem:[%s0 + $0x18] sm:$0xf]
  %v21 = vld [vmem:[%s0 + $0x1c] sm:$0xf]
  %v22 = vunpack.c.l.bf16 %v14
  %v23 = vunpack.c.l.bf16 %v15
  %v24 = vunpack.c.l.bf16 %v16
  %v25 = vunpack.c.l.bf16 %v17
  %v26 = vunpack.c.l.bf16 %v18
  %v27 = vunpack.c.l.bf16 %v19
  %v28 = vunpack.c.l.bf16 %v20
  %v29 = vunpack.c.l.bf16 %v21
  %vm30 = vcmask 261120
  %v31 = vsel %vm30, %v22, 0.0
  %v32 = vrot.slane %v31, 4
  %v33 = vadd.f32 %v31, %v32
  %v34 = vrot.slane %v33, 2
  %v35 = vadd.f32 %v33, %v34
  %v36 = vrot.slane %v35, 1
  %v37 = vadd.f32 %v35, %v36
  %v38 = vsel %vm30, %v23, 0.0
  %v39 = vrot.slane %v38, 4
  %v40 = vadd.f32 %v38, %v39
  %v41 = vrot.slane %v40, 2
  %v42 = vadd.f32 %v40, %v41
  %v43 = vrot.slane %v42, 1
  %v44 = vadd.f32 %v42, %v43
  %v45 = vsel %vm30, %v24, 0.0
  %v46 = vrot.slane %v45, 4
  %v47 = vadd.f32 %v45, %v46
  %v48 = vrot.slane %v47, 2
  %v49 = vadd.f32 %v47, %v48
  %v50 = vrot.slane %v49, 1
  %v51 = vadd.f32 %v49, %v50
  %v52 = vsel %vm30, %v25, 0.0
  %v53 = vrot.slane %v52, 4
  %v54 = vadd.f32 %v52, %v53
  %v55 = vrot.slane %v54, 2
  %v56 = vadd.f32 %v54, %v55
  %v57 = vrot.slane %v56, 1
  %v58 = vadd.f32 %v56, %v57
  %v59 = vsel %vm30, %v26, 0.0
  %v60 = vrot.slane %v59, 4
  %v61 = vadd.f32 %v59, %v60
  %v62 = vrot.slane %v61, 2
  %v63 = vadd.f32 %v61, %v62
  %v64 = vrot.slane %v63, 1
  %v65 = vadd.f32 %v63, %v64
  %v66 = vsel %vm30, %v27, 0.0
  %v67 = vrot.slane %v66, 4
  %v68 = vadd.f32 %v66, %v67
  %v69 = vrot.slane %v68, 2
  %v70 = vadd.f32 %v68, %v69
  %v71 = vrot.slane %v70, 1
  %v72 = vadd.f32 %v70, %v71
  %v73 = vsel %vm30, %v28, 0.0
  %v74 = vrot.slane %v73, 4
  %v75 = vadd.f32 %v73, %v74
  %v76 = vrot.slane %v75, 2
  %v77 = vadd.f32 %v75, %v76
  %v78 = vrot.slane %v77, 1
  %v79 = vadd.f32 %v77, %v78
  %v80 = vsel %vm30, %v29, 0.0
  %v81 = vrot.slane %v80, 4
  %v82 = vadd.f32 %v80, %v81
  %v83 = vrot.slane %v82, 2
  %v84 = vadd.f32 %v82, %v83
  %v85 = vrot.slane %v84, 1
  %v86 = vadd.f32 %v84, %v85
  %v87 = vld [vmem:[%s1] sm:$0xff]
  %v88 = vld [vmem:[%s1 + $0x8] sm:$0xff]
  %v89 = vld [vmem:[%s1 + $0x10] sm:$0xff]
  %v90 = vld [vmem:[%s1 + $0x18] sm:$0xff]
  %v91 = vld [vmem:[%s2] sm:$0x1]
  %v93 = vperm.slane %v91, 0
  %vm103 = vcmask 1041409
  %v104 = vsel %vm103, %v44, %v37
  %vm105 = vcmask 1042434
  %v106 = vsel %vm105, %v51, %v104
  %vm107 = vcmask 1043459
  %v108 = vsel %vm107, %v58, %v106
  %vm109 = vcmask 1044484
  %v110 = vsel %vm109, %v65, %v108
  %vm111 = vcmask 1045509
  %v112 = vsel %vm111, %v72, %v110
  %vm113 = vcmask 1046534
  %v114 = vsel %vm113, %v79, %v112
  %vm115 = vcmask 1047559
  %v116 = vsel %vm115, %v86, %v114
  %v117 = vsel %vm30, %v116, 0
  %119 = vmatpush.msra.mxu0 0.0
  %120 = vmatpush.msra.mxu0 0.0
  %121 = vmatpush.msra.mxu0 0.0
  %122 = vmatpush.msra.mxu0 0.0
  %123 = vmatpush.msra.mxu0 0.0
  %124 = vmatpush.msra.mxu0 0.0
  %125 = vmatpush.msra.mxu0 0.0
  %126 = vmatpush.msra.mxu0 0.0
  %127 = vmatpush.msra.mxu0 0.0
  %128 = vmatpush.msra.mxu0 0.0
  %129 = vmatpush.msra.mxu0 0.0
  %130 = vmatpush.msra.mxu0 0.0
  %131 = vmatpush.msra.mxu0 %v90
  %132 = vmatpush.msra.mxu0 %v89
  %133 = vmatpush.msra.mxu0 %v88
  %134 = vmatpush.msra.mxu0 %v87
  %135 = vmatmul.f32.gmra.mxu0 %v117
  %v136 = vpop.f32.mrf.mxu0
  %v137 = vadd.f32 %v93, %v136
  %138 = vdwg.mxu0
  %vm139 = vcmask 23552
  %v140 = vsel %vm139, %v137, -inf
  %141 = vmax.xlane.f32.xlu0 %v140
  %v142 = vpop.xlane.xlu0 %141
  %v143 = vsub.f32 %v137, %v142
  %v144 = vmul.f32 %v143, 1.442695
  %v145 = vpow.pop %v144
  %v146 = vsel %vm139, %v145, 0.0
  %147 = vadd.xlane.f32.xlu0 %v146
  %v148 = vpop.xlane.xlu0 %147
  %v149 = vrcp.pop %v148
  %v150 = vmul.f32 %v148, %v149
  %v151 = vsub.f32 1.0, %v150
  %v152 = vmul.f32 %v149, %v151
  %v153 = vadd.f32 %v149, %v152
  %vm154 = vweird.f32 %v148
  %vm155 = vweird.f32 %v149
  %vm156 = vmor %vm154, %vm155
  %v157 = vsel %vm156, %v149, %v153
  %v158 = vand.u32 2147483647, %v148
  %vm159 = vcmp.eq.f32.partialorder %v158, 8.507059e+37
  %v160 = vand.u32 %v148, 2147483648
  %v161 = vor.u32 1.1754944e-38, %v160
  %v162 = vsel %vm159, %v161, %v157
  %v163 = vmul.f32 %v145, %v162
  %164 = vst.msk [vmem:[%s3] sm:$0xff] %vm139, %v163
  // Predicated region
  $region14: #{tpu_custom_call.1} parent=0 // pred_check
    _
  $region15: #{tpu_custom_call.1} parent=0 // pred_check_branch
    %166 = sbr.rel (0) target = $region17
  $region16: #{tpu_custom_call.1} parent=0 // pred_region
    _
  $region17: #{tpu_custom_call.1} parent=0 // pred_fallthru
    _
  // Predicated region
  $region18: #{tpu_custom_call.1} parent=0 // pred_check
    _
  $region19: #{tpu_custom_call.1} parent=0 // pred_check_branch
    %168 = sbr.rel (0) target = $region21
  $region20: #{tpu_custom_call.1} parent=0 // pred_region
    _
  $region21: #{tpu_custom_call.1} parent=0 // pred_fallthru
    _

</llo_original>
